<compile_context>
chip_gen: v7x
topology: tpu7x:2x2x1
jax: 0.10.0
libtpu: 0.0.40
codegen_flags: <defaults>
</compile_context>

<pallas_src>
import math

import jax
import jax.numpy as jnp
from jax import lax
from jax.experimental import pallas as pl
from jax.experimental.pallas import tpu as pltpu


N_D_SHARDS = 2            # leading "parallel" grid axis for the Gram pass (v7x: 2 TCs)
MAX_TILE_D = 65536        # lanes per streamed block; (16, 64K) f32 = 4 MiB in VMEM
VMEM_LIMIT_BYTES = 32 * 1024 * 1024   # explicit; raises v5e's 16 MiB scoped default


def _pad_and_tile(d, max_tile=MAX_TILE_D, shards=N_D_SHARDS):
    """Pad D so it splits into `shards` equal shard ranges of whole TILE_D blocks."""
    unit = 128 * shards
    d_pad = -(-d // unit) * unit
    per_shard = d_pad // shards
    tile = min(max_tile, per_shard)           # per_shard is a multiple of 128
    if per_shard % tile:
        per_shard = -(-per_shard // tile) * tile
        d_pad = per_shard * shards
    return tile, d_pad


# ----------------------------- Pallas kernels ------------------------------ #

def _gram_kernel(x_ref, g_ref):
    """Partial Gram accumulation over the D grid axis (axis 1 of the grid).

    x_ref: (N, tile_d) lane-dense slab of the (N, D) layout.
    g_ref: (N, N) resident partial-Gram block for this D shard.
    """
    k = pl.program_id(1)

    @pl.when(k == 0)
    def _():
        g_ref[...] = jnp.zeros_like(g_ref)

    x = x_ref[...]
    # gram += x x^T : contraction over the lane (D) dim of both operands
    # (the attention-scores NT orientation -- MXU native, no relayout).
    g_ref[...] += lax.dot_general(
        x, x,
        dimension_numbers=(((1,), (1,)), ((), ())),
        preferred_element_type=jnp.float32,
    )


def _combine_kernel(w_ref, x_ref, o_ref):
    """Lane-dense weighted combine: (2, tile_d) = (2, N) @ (N, tile_d)."""
    o_ref[...] = lax.dot_general(
        w_ref[...], x_ref[...],
        dimension_numbers=(((1,), (0,)), ((), ())),
        preferred_element_type=jnp.float32,
    )


# ----------------------------- Pallas wrappers ------------------------------ #

def pallas_gram(xt_pad, tile):
    """xt_pad: (N, d_pad) lane-dense, d_pad % (N_D_SHARDS * tile) == 0 -> (N, N) Gram."""
    n, d_pad = xt_pad.shape
    assert d_pad % (N_D_SHARDS * tile) == 0
    steps = d_pad // (N_D_SHARDS * tile)      # grid steps per D shard

    partial = pl.pallas_call(
        _gram_kernel,
        out_shape=jax.ShapeDtypeStruct((N_D_SHARDS, n, n), jnp.float32),
        grid_spec=pltpu.PrefetchScalarGridSpec(
            num_scalar_prefetch=0,
            grid=(N_D_SHARDS, steps),
            in_specs=[pl.BlockSpec((n, tile),
                                   lambda c, k: (0, c * steps + k))],
            out_specs=pl.BlockSpec((None, n, n), lambda c, k: (c, 0, 0)),
        ),
        compiler_params=pltpu.CompilerParams(
            dimension_semantics=("parallel", "arbitrary"),   # shard D / reduce D
            vmem_limit_bytes=VMEM_LIMIT_BYTES),
    )(xt_pad)
    return partial.sum(axis=0)                # tiny (2, N, N) -> (N, N) epilogue


def _finalize_cdist(gram):
    """Gram (N, N) -> pairwise Euclidean distances (N, N).

    NOTE: d2 = |xi|^2 + |xj|^2 - 2<xi,xj> is cancellation-prone for near-
    duplicate clients (torch.cdist uses the difference form); exact enough at
    demo scales and the diagonal is exactly 0.
    """
    sq = jnp.diagonal(gram)
    d2 = sq[:, None] + sq[None, :] - 2.0 * gram
    return jnp.sqrt(jnp.maximum(d2, 0.0))


def pallas_combine(xt_pad, w2, tile):
    """xt_pad: (N, d_pad), w2: (2, N) -> (2, d_pad) = w2 @ xt_pad, lane-dense."""
    n, d_pad = xt_pad.shape
    assert d_pad % tile == 0
    steps = d_pad // tile
    return pl.pallas_call(
        _combine_kernel,
        out_shape=jax.ShapeDtypeStruct((2, d_pad), jnp.float32),
        grid_spec=pltpu.PrefetchScalarGridSpec(
            num_scalar_prefetch=0,
            grid=(steps,),
            in_specs=[pl.BlockSpec((2, n), lambda k: (0, 0)),
                      pl.BlockSpec((n, tile), lambda k: (0, k))],
            out_specs=pl.BlockSpec((2, tile), lambda k: (0, k)),
        ),
        compiler_params=pltpu.CompilerParams(
            dimension_semantics=("parallel",),   # independent over D (v7x megacore)
            vmem_limit_bytes=VMEM_LIMIT_BYTES),
    )(w2, xt_pad)


# --------------------------- small JAX glue logic --------------------------- #
# TODO(synk): the data-dependent top-k / argmin / entropy / reputation scalar
# logic stays in plain JAX (tiny N=10 vectors); only the O(D*N^2) work runs in
# Pallas.

def _entropy_over_4(p):
    # -1/log(4) * sum_i p_i*log(p_i), skipping exact zeros (matches the
    # "if p[0, i] != 0" guard in the PyTorch code).
    safe = jnp.where(p != 0, p, 1.0)
    s = jnp.sum(jnp.where(p != 0, p * jnp.log(safe), 0.0))
    return (-1.0 / math.log(4.0)) * s


def _min_normal_s(data):           # data: (4,)
    mn, mx = data.min(), data.max()
    same = mn == mx
    denom = jnp.where(same, 1.0, mx - mn)
    normalized = jnp.where(same, data, (mx - data) / denom)
    p = normalized / normalized.sum()
    return normalized, _entropy_over_4(p)


def _min_normal_r(data):           # data: (4,)
    mn, mx = data.min(), data.max()
    same = mn == mx
    denom = jnp.where(same, 1.0, mx - mn)
    normalized = jnp.where(same, data, (data - mn) / denom)
    q = normalized / normalized.sum()
    return normalized, _entropy_over_4(q)


@jax.jit
def get_krum(inp, r_all):
    """inp: (1, D, N), r_all: (N,) global reputation state (N must be 10)."""
    B, D, N = inp.shape
    assert B == 1 and N == 10, "reference hard-codes batch=1, n=10 (4 neighbors)"
    f = N // 2
    k = N - f - 2                      # == 3 for N == 10 (4 neighbors incl. self)

    # One lane-dense (N, D) slab shared by both Pallas kernels.
    # TODO(synk): have the upstream producer emit (1, N, D) to drop this pass.
    tile, d_pad = _pad_and_tile(D)
    xt = inp[0].T                                           # (N, D)
    if d_pad != D:
        xt = jnp.pad(xt, ((0, 0), (0, d_pad - D)))          # zero cols: exact no-op

    gram = pallas_gram(xt, tile)                            # (N, N) Pallas/MXU
    cdist = _finalize_cdist(gram)                           # tiny JAX epilogue

    neg_vals, nbh = lax.top_k(-cdist, k + 1)                # smallest k+1 dists
    nbhDist = -neg_vals                                     # (N, 4)
    sum_nbh = nbhDist.sum(axis=1)                           # (N,)
    i_star = jnp.argmin(sum_nbh)
    ii_star = nbh[i_star]                                   # (4,) neighbor ids
    score = sum_nbh[ii_star]                                # (4,)

    _, Es = _min_normal_s(score)

    # Reputation update (functional version of the global r_all mutation).
    is_nb = jnp.zeros((N,), bool).at[ii_star].set(True)
    in_range = (r_all > -1.0) & (r_all < 1.0)
    r_new = jnp.where(
        in_range,
        jnp.where(is_nb, r_all + 0.05, r_all - sum_nbh / 4.0 * 0.1),
        r_all,
    )
    reputation = r_new[ii_star]                             # (4,)
    _, Er = _min_normal_r(reputation)

    alpha = (1.0 - Es) / (2.0 - Es - Er)
    beta = (1.0 - Er) / (2.0 - Es - Er)
    combined = alpha * score + beta * reputation
    xi = combined / combined.sum()                          # (4,) mixing weights

    # Weight rows: row0 -> krum one-hot(i_star), row1 -> multi-krum weights xi.
    w2 = jnp.zeros((2, N), jnp.float32)
    w2 = w2.at[0, i_star].set(1.0)
    w2 = w2.at[1, ii_star].add(xi)

    out2 = pallas_combine(xt, w2, tile)[:, :D]              # (2, D) lane-dense
    krum = out2[0][None, :, None]                           # (1, D, 1)
    mkrum = out2[1][None, :, None]                          # (1, D, 1)
    return krum, mkrum, r_new


class Net:
    """JAX/Pallas port of the PyTorch Net (krum / multi-krum aggregator)."""

    def __init__(self, mode="mkrum", n=10):
        assert mode in ["krum", "mkrum"]
        assert n == 10, "reference hard-codes 4 neighbors and a length-10 r_all"
        self.mode = mode
        # Deterministic init of the module-level global state r_all = zeros(10).
        self.r_all = jnp.zeros((n,), jnp.float32)

    def __call__(self, inp):
        krum, mkrum, r_new = get_krum(inp.astype(jnp.float32), self.r_all)
        self.r_all = r_new            # persist the reputation side effect
        return krum if self.mode == "krum" else mkrum


# ---------------------------------- demo ----------------------------------- #

if __name__ == "__main__":
    key = jax.random.PRNGKey(0)
    B, D, N = 1, 32, 10   # reference hard-codes 4 nearest neighbors + len-10 r_all
    x = jax.random.normal(key, (B, D, N), dtype=jnp.float32)

    net = Net(mode="mkrum", n=N)
    out = jax.block_until_ready(net(x))
    assert out.shape == (B, D, 1), out.shape
    assert out.dtype == jnp.float32

    # Second step exercises the stateful reputation-update path.
    out_b = jax.block_until_ready(net(x))
    assert out_b.shape == (B, D, 1)

    # Numerical check of the multi-shard / multi-step grid (and pad) path of
    # both kernels, with a reduced tile to force several accumulation steps.
    Db = 4200                                  # not a multiple of the tile unit
    xb = jax.random.normal(jax.random.PRNGKey(1), (Db, N), jnp.float32)
    tile, d_pad = _pad_and_tile(Db, max_tile=512)
    xt = jnp.pad(xb.T, ((0, 0), (0, d_pad - Db)))

    gram = jax.block_until_ready(pallas_gram(xt, tile))
    d_pl = _finalize_cdist(gram)
    xtt = xb.T
    d_ref = jnp.sqrt(jnp.sum((xtt[:, None, :] - xtt[None, :, :]) ** 2, axis=-1))
    assert jnp.allclose(d_pl, d_ref, rtol=1e-3, atol=1e-2), "cdist mismatch"

    wt = jax.random.normal(jax.random.PRNGKey(2), (2, N), jnp.float32)
    c_pl = jax.block_until_ready(pallas_combine(xt, wt, tile))[:, :Db]
    c_ref = jnp.einsum("kn,dn->kd", wt, xb,
                       precision=jax.lax.Precision.HIGHEST)
    assert jnp.allclose(c_pl, c_ref, rtol=1e-3, atol=1e-2), "combine mismatch"

    print("KERNEL_OK")
</pallas_src>

<mosaic_0001>
module attributes {stable_mosaic.version = 11 : i64} {
  func.func @_gram_kernel(%arg0: i32, %arg1: i32, %arg2: memref<10x128xf32, #tpu.memory_space<vmem>>, %arg3: memref<1x10x10xf32, #tpu.memory_space<vmem>>) attributes {dimension_semantics = [#tpu.dimension_semantics<parallel>, #tpu.dimension_semantics<arbitrary>], iteration_bounds = array<i64: 2, 1>, scalar_prefetch = 0 : i64, scratch_operands = 0 : i64, tpu.core_type = #tpu.core_type<tc>, window_params = [{transform_indices = @transform_0, window_bounds = array<i64: 10, 128>}, {transform_indices = @transform_1, window_bounds = array<i64: 1, 10, 10>}]} {
    %c0_i32 = arith.constant 0 : i32
    %0 = arith.cmpi eq, %arg1, %c0_i32 : i32
    %1 = arith.extui %0 : i1 to i32
    %c0_i32_0 = arith.constant 0 : i32
    %2 = arith.cmpi ne, %1, %c0_i32_0 : i32
    scf.if %2 {
      %cst_8 = arith.constant 0.000000e+00 : f32
      %11 = vector.broadcast %cst_8 : f32 to vector<10x10xf32>
      %c0_9 = arith.constant 0 : index
      %c0_10 = arith.constant 0 : index
      %c0_11 = arith.constant 0 : index
      %12 = vector.load %arg3[%c0_9, %c0_10, %c0_11] : memref<1x10x10xf32, #tpu.memory_space<vmem>>, vector<1x10x10xf32>
      %13 = vector.shape_cast %12 : vector<1x10x10xf32> to vector<10x10xf32>
      %14 = vector.shape_cast %11 : vector<10x10xf32> to vector<1x10x10xf32>
      tpu.vector_store %arg3[%c0_9, %c0_10, %c0_11], %14 {strides = array<i32>} : memref<1x10x10xf32, #tpu.memory_space<vmem>>, vector<1x10x10xf32>,
    } else {
    }
    %c0 = arith.constant 0 : index
    %c0_1 = arith.constant 0 : index
    %3 = vector.load %arg2[%c0, %c0_1] : memref<10x128xf32, #tpu.memory_space<vmem>>, vector<10x128xf32>
    %c0_2 = arith.constant 0 : index
    %c0_3 = arith.constant 0 : index
    %c0_4 = arith.constant 0 : index
    %4 = vector.load %arg3[%c0_2, %c0_3, %c0_4] : memref<1x10x10xf32, #tpu.memory_space<vmem>>, vector<1x10x10xf32>
    %5 = vector.shape_cast %4 : vector<1x10x10xf32> to vector<10x10xf32>
    %cst = arith.constant dense<0.000000e+00> : vector<10x10xf32>
    %6 = tpu.matmul %3, %3, %cst {dimension_numbers = #tpu.dot_dimension_numbers<[1], [1], [0], [0], [0, 0, 1, 0], [], []>} : vector<10x128xf32>, vector<10x128xf32>, vector<10x10xf32> -> vector<10x10xf32>
    %7 = arith.addf %5, %6 : vector<10x10xf32>
    %c0_5 = arith.constant 0 : index
    %c0_6 = arith.constant 0 : index
    %c0_7 = arith.constant 0 : index
    %8 = vector.load %arg3[%c0_5, %c0_6, %c0_7] : memref<1x10x10xf32, #tpu.memory_space<vmem>>, vector<1x10x10xf32>
    %9 = vector.shape_cast %8 : vector<1x10x10xf32> to vector<10x10xf32>
    %10 = vector.shape_cast %7 : vector<10x10xf32> to vector<1x10x10xf32>
    tpu.vector_store %arg3[%c0_5, %c0_6, %c0_7], %10 {strides = array<i32>} : memref<1x10x10xf32, #tpu.memory_space<vmem>>, vector<1x10x10xf32>,
    return
  }
  func.func @transform_0(%arg0: i32, %arg1: i32) -> (i32, i32) {
    %c1_i32 = arith.constant 1 : i32
    %0 = arith.muli %arg0, %c1_i32 : i32
    %1 = arith.addi %0, %arg1 : i32
    %c0_i32 = arith.constant 0 : i32
    %c0_i32_0 = arith.constant 0 : i32
    return %c0_i32, %1 : i32, i32
  }
  func.func @transform_1(%arg0: i32, %arg1: i32) -> (i32, i32, i32) {
    %c0_i32 = arith.constant 0 : i32
    %c0_i32_0 = arith.constant 0 : i32
    %c0_i32_1 = arith.constant 0 : i32
    return %arg0, %c0_i32, %c0_i32_0 : i32, i32, i32
  }
}

module attributes {stable_mosaic.version = 11 : i64} {
  func.func @_combine_kernel(%arg0: i32, %arg1: memref<2x10xf32, #tpu.memory_space<vmem>>, %arg2: memref<10x128xf32, #tpu.memory_space<vmem>>, %arg3: memref<2x128xf32, #tpu.memory_space<vmem>>) attributes {dimension_semantics = [#tpu.dimension_semantics<parallel>], iteration_bounds = array<i64: 2>, scalar_prefetch = 0 : i64, scratch_operands = 0 : i64, tpu.core_type = #tpu.core_type<tc>, window_params = [{pipeline_mode = #tpu.pipeline_mode<synchronous>, transform_indices = @transform_0, window_bounds = array<i64: 2, 10>}, {transform_indices = @transform_1, window_bounds = array<i64: 10, 128>}, {transform_indices = @transform_2, window_bounds = array<i64: 2, 128>}]} {
    %c0 = arith.constant 0 : index
    %c0_0 = arith.constant 0 : index
    %0 = vector.load %arg1[%c0, %c0_0] : memref<2x10xf32, #tpu.memory_space<vmem>>, vector<2x10xf32>
    %c0_1 = arith.constant 0 : index
    %c0_2 = arith.constant 0 : index
    %1 = vector.load %arg2[%c0_1, %c0_2] : memref<10x128xf32, #tpu.memory_space<vmem>>, vector<10x128xf32>
    %cst = arith.constant dense<0.000000e+00> : vector<2x128xf32>
    %2 = tpu.matmul %0, %1, %cst {dimension_numbers = #tpu.dot_dimension_numbers<[1], [0], [0], [1], [0, 0, 1, 1], [], []>} : vector<2x10xf32>, vector<10x128xf32>, vector<2x128xf32> -> vector<2x128xf32>
    %c0_3 = arith.constant 0 : index
    %c0_4 = arith.constant 0 : index
    %3 = vector.load %arg3[%c0_3, %c0_4] : memref<2x128xf32, #tpu.memory_space<vmem>>, vector<2x128xf32>
    tpu.vector_store %arg3[%c0_3, %c0_4], %2 {strides = array<i32>} : memref<2x128xf32, #tpu.memory_space<vmem>>, vector<2x128xf32>,
    return
  }
  func.func @transform_0(%arg0: i32) -> (i32, i32) {
    %c0_i32 = arith.constant 0 : i32
    %c0_i32_0 = arith.constant 0 : i32
    %c0_i32_1 = arith.constant 0 : i32
    return %c0_i32, %c0_i32_0 : i32, i32
  }
  func.func @transform_1(%arg0: i32) -> (i32, i32) {
    %c0_i32 = arith.constant 0 : i32
    %c0_i32_0 = arith.constant 0 : i32
    return %c0_i32, %arg0 : i32, i32
  }
  func.func @transform_2(%arg0: i32) -> (i32, i32) {
    %c0_i32 = arith.constant 0 : i32
    %c0_i32_0 = arith.constant 0 : i32
    return %c0_i32, %arg0 : i32, i32
  }
}

</mosaic_0001>

<llo_original>
// kernel: get_krum.2
$region0: #{get_krum.2}
  #allocation0 [shape = 'u32[]', space=smem, size = 0x4, offset = 0x4, fixed_abs, tag = 'smem constant byte address 0x4 - core index']
  #allocation1 [shape = 'u32[144,128]{1,0:T(1,128)}', space=vmem, size = 0x12000, scoped, tag = 'internal scratch']
  %s0 = inlined_call_operand.vmem [shape: f32[10,256], index: 0, kind: input, shape index: {}]
  %s1 = inlined_call_operand.vmem [shape: f32[2,10,10], index: 1, kind: output, shape index: {}]
  %s2 = sld [smem:[#allocation0]]
  $region79: #{get_krum.2} parent=0
    _
  %s4 = ssub.s32 1, %s2
  %s5 = scalar_select 0, %s4, %s2
  $region1: #{get_krum.2} parent=0
    #allocation2 [shape = 'u8[16384]{0}', space=vmem, size = 0x4000, scoped, tag = 'input window, operand 0']
    loop: start=0, step=1, limit=4
    $region2: #{get_krum.2} parent=1 // loop_pre_header
      _
    $region3: #{get_krum.2} parent=1 // loop_header
      %s7 = sphi 0, %s11
      %p8 = scmp.ge.s32.totalorder %s7, 4
      %s14 = sphi 0, %s26
      %s15 = sphi 0, %s22
      %s16 = sphi 0, %s14
      %s17 = sphi 0, %s15
      %s18 = sphi 0, %s16
      %s19 = sphi 0, %s17
      %s31 = sphi 0, %s33
      %s34 = sphi 0, %s31
      %s35 = sphi 0, %s34
      %s51 = sphi 0, %s35
      %s57 = sphi 0, %s59
      %s60 = sphi 0, %s57
      %s61 = sphi 0, %s60
      %s77 = sphi 0, %s61
    $region4: #{get_krum.2} parent=1 // loop_header_branch
      %10 = sbr.rel (%p8) target = $region8
    $region5: #{get_krum.2} parent=1 // loop_body
      %s12 = ssub.s32 %s7, 1
      %s13 = ssub.s32 %s7, 2
      %s20 = sadd.s32 1, %s15
      %p21 = scmp.ge.s32.totalorder %s20, 1
      %s22 = scalar_select %p21, 0, %s20
      %s23 = sadd.s32 1, %s14
      %s24 = scalar_select %p21, %s23, %s14
      %p25 = scmp.ge.s32.totalorder %s24, 2
      %s26 = scalar_select %p25, 0, %s24
      %s27 = sadd.s32 %s14, %s15
      %s28 = sadd.s32 %s26, %s22
      %s29 = ssub.s32 %s27, %s28
      %p30 = scmp.eq.s32.totalorder %s29, 0
      %s32 = sadd.s32 %s31, 1
      %s33 = scalar_select %p30, %s31, %s32
      %p36 = pneg %p30
      %p37 = scmp.eq.s32.totalorder %s7, 1
      %p38 = por %p36, %p37
      %p39 = scmp.ne.s32.totalorder %s31, %s34
      %p40 = scmp.eq.s32.totalorder %s7, 0
      %p41 = por %p39, %p40
      %p42 = scmp.ne.s32.totalorder %s31, %s34
      %p43 = scmp.eq.s32.totalorder %s12, 1
      %p44 = por %p42, %p43
      %p45 = scmp.ne.s32.totalorder %s34, %s35
      %p46 = scmp.eq.s32.totalorder %s12, 0
      %p47 = por %p45, %p46
      %p48 = scmp.ne.s32.totalorder %s34, %s35
      %p49 = scmp.eq.s32.totalorder %s13, 1
      %p50 = por %p48, %p49
      %p52 = scmp.ne.s32.totalorder %s35, %s51
      %p53 = scmp.eq.s32.totalorder %s13, 0
      %p54 = por %p52, %p53
      %s55 = ssub.s32 %s14, %s26
      %p56 = scmp.eq.s32.totalorder %s55, 0
      %s58 = sadd.s32 %s57, 1
      %s59 = scalar_select %p56, %s57, %s58
      %p62 = pneg %p56
      %p63 = scmp.eq.s32.totalorder %s7, 1
      %p64 = por %p62, %p63
      %p65 = scmp.ne.s32.totalorder %s57, %s60
      %p66 = scmp.eq.s32.totalorder %s7, 0
      %p67 = por %p65, %p66
      %p68 = scmp.ne.s32.totalorder %s57, %s60
      %p69 = scmp.eq.s32.totalorder %s12, 1
      %p70 = por %p68, %p69
      %p71 = scmp.ne.s32.totalorder %s60, %s61
      %p72 = scmp.eq.s32.totalorder %s12, 0
      %p73 = por %p71, %p72
      %p74 = scmp.ne.s32.totalorder %s60, %s61
      %p75 = scmp.eq.s32.totalorder %s13, 1
      %p76 = por %p74, %p75
      %p78 = scmp.ne.s32.totalorder %s61, %s77
      %p79 = scmp.eq.s32.totalorder %s13, 0
      %p80 = por %p78, %p79
      %p81 = scmp.le.s32.totalorder 1, %s7
      %p82 = scmp.lt.s32.totalorder %s7, 3
      %p83 = pnand %p81, %p82
      %p84 = pneg %p83
      // Predicated region
      $region9: #{get_krum.2} parent=5 // pred_check
        _
      $region10: #{get_krum.2} parent=5 // pred_check_branch
        %86 = sbr.rel (%p83) target = $region12
      $region11: #{get_krum.2} parent=5 // pred_region
        %s87 = ssub.s32 %s7, 1
      $region12: #{get_krum.2} parent=5 // pred_fallthru
        _
      %p88 = scmp.lt.s32.totalorder %s7, 2
      // Predicated region
      $region13: #{get_krum.2} parent=5 // pred_check
        %p89 = pneg %p88
      $region14: #{get_krum.2} parent=5 // pred_check_branch
        %91 = sbr.rel (%p89) target = $region16
      $region15: #{get_krum.2} parent=5 // pred_region
        // Predicated region
        $region17: #{get_krum.2} parent=15 // pred_check
          %p92 = pneg %p41
        $region18: #{get_krum.2} parent=15 // pred_check_branch
          %94 = sbr.rel (%p92) target = $region20
        $region19: #{get_krum.2} parent=15 // pred_region
          %s95 = sand.u32 %s31, 1
          %s96 = sand.u32 %s31, 1
          %s97 = smul.addr %s96, 16
          %s98 = scalar_lea.vmem [#allocation2], %s97
          %s99 = sadd.s32 %s14, %s15
          %s100 = smul.addr %s99, 8
          %s101 = scalar_lea.vmem %s0, %s100
          // Predicated region
          $region21: #{get_krum.2} parent=19 // pred_check
            _
          $region22: #{get_krum.2} parent=19 // pred_check_branch
            %103 = sbr.rel (0) target = $region24
          $region23: #{get_krum.2} parent=19 // pred_region
            // Predicated region
            $region25: #{get_krum.2} parent=23 // pred_check
              _
            $region26: #{get_krum.2} parent=23 // pred_check_branch
              %105 = sbr.rel (0) target = $region28
            $region27: #{get_krum.2} parent=23 // pred_region
              // Predicated region
              $region40: #{get_krum.2} parent=27 // pred_check
                _
              $region41: #{get_krum.2} parent=27 // pred_check_branch
                %122 = sbr.rel (0) target = $region43
              $region42: #{get_krum.2} parent=27 // pred_region
                loop: start=0, step=1, limit=1
                $region44: #{get_krum.2} parent=42 // loop_pre_header
                  _
                $region45: #{get_krum.2} parent=42 // loop_header
                  %s124 = sphi 0, %s128
                  %p125 = scmp.ge.s32.totalorder %s124, 1
                  %s129 = sphi %s101, %s101
                  %s130 = sphi %s98, %s98
                $region46: #{get_krum.2} parent=42 // loop_header_branch
                  %127 = sbr.rel (%p125) target = $region50
                $region47: #{get_krum.2} parent=42 // loop_body
                  %v131 = vld [vmem:[%s129] sm:$0xff]
                  %132 = vst [vmem:[%s130] sm:$0xff] %v131
                  %v133 = vld [vmem:[%s129 + $0x10] sm:$0xff]
                  %134 = vst [vmem:[%s130 + $0x8] sm:$0xff] %v133
                $region48: #{get_krum.2} parent=42 // loop_footer
                  %s128 = sadd.s32 1, %s124
                $region49: #{get_krum.2} parent=42 // loop_footer_branch
                  %123 = sbr.rel target = $region45
                $region50: #{get_krum.2} parent=42 // loop_exit
                  _
              $region43: #{get_krum.2} parent=27 // pred_fallthru
                _
              // Predicated region
              $region51: #{get_krum.2} parent=27 // pred_check
                _
              $region52: #{get_krum.2} parent=27 // pred_check_branch
                %136 = sbr.rel target = $region54
              $region53: #{get_krum.2} parent=27 // pred_region
                _
              $region54: #{get_krum.2} parent=27 // pred_fallthru
                _
            $region28: #{get_krum.2} parent=23 // pred_fallthru
              _
            // Predicated region
            $region29: #{get_krum.2} parent=23 // pred_check
              _
            $region30: #{get_krum.2} parent=23 // pred_check_branch
              %107 = sbr.rel target = $region32
            $region31: #{get_krum.2} parent=23 // pred_region
              loop: start=0, step=1, limit=1
              $region33: #{get_krum.2} parent=31 // loop_pre_header
                _
              $region34: #{get_krum.2} parent=31 // loop_header
                %s110 = sphi 0, %s114
                %p111 = scmp.ge.s32.totalorder %s110, 1
                %s115 = sphi %s101, %s101
                %s116 = sphi %s98, %s98
              $region35: #{get_krum.2} parent=31 // loop_header_branch
                %113 = sbr.rel (%p111) target = $region39
              $region36: #{get_krum.2} parent=31 // loop_body
                %v117 = vld [vmem:[%s115] sm:$0xff]
                %118 = vst [vmem:[%s116] sm:$0xff] %v117
                %v119 = vld [vmem:[%s115 + $0x10] sm:$0xff]
                %120 = vst [vmem:[%s116 + $0x8] sm:$0xff] %v119
              $region37: #{get_krum.2} parent=31 // loop_footer
                %s114 = sadd.s32 1, %s110
              $region38: #{get_krum.2} parent=31 // loop_footer_branch
                %109 = sbr.rel target = $region34
              $region39: #{get_krum.2} parent=31 // loop_exit
                _
            $region32: #{get_krum.2} parent=23 // pred_fallthru
              _
          $region24: #{get_krum.2} parent=19 // pred_fallthru
            _
          %137 = vnop
        $region20: #{get_krum.2} parent=15 // pred_fallthru
          _
      $region16: #{get_krum.2} parent=5 // pred_fallthru
        _
      %p138 = scmp.le.s32.totalorder 1, %s7
      %p139 = scmp.lt.s32.totalorder %s7, 3
      %p140 = pnand %p138, %p139
      %p141 = pneg %p140
      // Predicated region
      $region55: #{get_krum.2} parent=5 // pred_check
        _
      $region56: #{get_krum.2} parent=5 // pred_check_branch
        %143 = sbr.rel (%p140) target = $region58
      $region57: #{get_krum.2} parent=5 // pred_region
        %s144 = ssub.s32 %s7, 1
        %s145 = sand.u32 %s34, 1
        %s146 = sand.u32 %s34, 1
        %s147 = smul.addr %s146, 16
        %s148 = scalar_lea.vmem [#allocation2], %s147
        // Predicated region
        $region59: #{get_krum.2} parent=57 // pred_check
          %p149 = pneg %p47
        $region60: #{get_krum.2} parent=57 // pred_check_branch
          %151 = sbr.rel (%p149) target = $region62
        $region61: #{get_krum.2} parent=57 // pred_region
          _
        $region62: #{get_krum.2} parent=57 // pred_fallthru
          _
        %s152 = sand.u32 %s34, 1
        %s153 = sand.u32 %s34, 1
        %s154 = smul.addr %s153, 16
        %s155 = scalar_lea.vmem [#allocation2], %s154
        %p156 = pneg %p47
        %p157 = pneg %p44
        %p158 = pneg %p73
        %p159 = pneg %p70
        %p160 = scmp.lt.s32.totalorder %s16, 1
        %s161 = scalar_select %p160, %s16, 1
        %s162 = smul.addr %s161, 2
        %s163 = smul.addr %s162, 8
        %s164 = scalar_lea.vmem %s1, %s163
        %s165 = sadd.s32 %s16, %s17
        %p166 = scmp.lt.s32.totalorder %s16, 1
        %s167 = scalar_select %p166, %s16, 1
        %s168 = smul.addr %s167, 2
        %s169 = smul.addr %s168, 8
        %s170 = scalar_lea.vmem %s1, %s169
        %p171 = scmp.eq.s32.totalorder %s17, 0
        // Predicated region
        $region63: #{get_krum.2} parent=57 // pred_check
          %p172 = pneg %p171
        $region64: #{get_krum.2} parent=57 // pred_check_branch
          %174 = sbr.rel (%p172) target = $region66
        $region65: #{get_krum.2} parent=57 // pred_region
          %vm175 = vcmask 80896
          %176 = vst.msk [vmem:[%s170] sm:$0xff] %vm175, 0.0
          %vm177 = vcmask 74752
          %178 = vst.msk [vmem:[%s170 + $0x8] sm:$0x3] %vm177, 0.0
        $region66: #{get_krum.2} parent=57 // pred_fallthru
          _
        %v179 = vld [vmem:[%s148] sm:$0xff]
        %v180 = vld [vmem:[%s148 + $0x8] sm:$0x3]
        %v181 = vld [vmem:[%s170] sm:$0xff]
        %v182 = vld [vmem:[%s170 + $0x8] sm:$0x3]
        %183 = vmatprep.subr.mxu0 0.0
        %184 = vmatpush1.xpose.msra.mxu0 %v179
        %185 = vmatprep.subr.mxu0 0.0
        %186 = vmatpush1.xpose.msra.mxu0 %v180
        %187 = vmatprep.subr.mxu0 0.0
        %188 = vmatpush1.xpose.msra.mxu0 0.0
        %189 = vmatprep.subr.mxu0 0.0
        %190 = vmatpush1.xpose.msra.mxu0 0.0
        %191 = vmatprep.subr.mxu0 0.0
        %192 = vmatpush1.xpose.msra.mxu0 0.0
        %193 = vmatprep.subr.mxu0 0.0
        %194 = vmatpush1.xpose.msra.mxu0 0.0
        %195 = vmatprep.subr.mxu0 0.0
        %196 = vmatpush1.xpose.msra.mxu0 0.0
        %197 = vmatprep.subr.mxu0 0.0
        %198 = vmatpush1.xpose.msra.mxu0 0.0
        %199 = vmatprep.subr.mxu0 0.0
        %200 = vmatpush1.xpose.msra.mxu0 0.0
        %201 = vmatprep.subr.mxu0 0.0
        %202 = vmatpush1.xpose.msra.mxu0 0.0
        %203 = vmatprep.subr.mxu0 0.0
        %204 = vmatpush1.xpose.msra.mxu0 0.0
        %205 = vmatprep.subr.mxu0 0.0
        %206 = vmatpush1.xpose.msra.mxu0 0.0
        %207 = vmatprep.subr.mxu0 0.0
        %208 = vmatpush1.xpose.msra.mxu0 0.0
        %209 = vmatprep.subr.mxu0 0.0
        %210 = vmatpush1.xpose.msra.mxu0 0.0
        %211 = vmatprep.subr.mxu0 0.0
        %212 = vmatpush1.xpose.msra.mxu0 0.0
        %213 = vmatprep.subr.mxu0 0.0
        %214 = vmatpush1.xpose.msra.mxu0 0.0
        %215 = vmatprep.subr.mxu0 0.0
        %216 = vmatpush1.xpose.msra.mxu0 0.0
        %217 = vmatprep.subr.mxu0 0.0
        %218 = vmatpush1.xpose.msra.mxu0 0.0
        %219 = vmatprep.subr.mxu0 0.0
        %220 = vmatpush1.xpose.msra.mxu0 0.0
        %221 = vmatprep.subr.mxu0 0.0
        %222 = vmatpush1.xpose.msra.mxu0 0.0
        %223 = vmatprep.subr.mxu0 0.0
        %224 = vmatpush1.xpose.msra.mxu0 0.0
        %225 = vmatprep.subr.mxu0 0.0
        %226 = vmatpush1.xpose.msra.mxu0 0.0
        %227 = vmatprep.subr.mxu0 0.0
        %228 = vmatpush1.xpose.msra.mxu0 0.0
        %229 = vmatprep.subr.mxu0 0.0
        %230 = vmatpush1.xpose.msra.mxu0 0.0
        %231 = vmatprep.subr.mxu0 0.0
        %232 = vmatpush1.xpose.msra.mxu0 0.0
        %233 = vmatprep.subr.mxu0 0.0
        %234 = vmatpush1.xpose.msra.mxu0 0.0
        %235 = vmatprep.subr.mxu0 0.0
        %236 = vmatpush1.xpose.msra.mxu0 0.0
        %237 = vmatprep.subr.mxu0 0.0
        %238 = vmatpush1.xpose.msra.mxu0 0.0
        %239 = vmatprep.subr.mxu0 0.0
        %240 = vmatpush1.xpose.msra.mxu0 0.0
        %241 = vmatprep.subr.mxu0 0.0
        %242 = vmatpush1.xpose.msra.mxu0 0.0
        %243 = vmatprep.subr.mxu0 0.0
        %244 = vmatpush1.xpose.msra.mxu0 0.0
        %245 = vmatprep.subr.mxu0 0.0
        %246 = vmatpush1.xpose.msra.mxu0 0.0
        %247 = vmatprep.mubr.f32.mxu0 0.0
        %248 = vmatmul.mubr.f32.gmra.mrb[0].mxu0 %v179
        %v249 = vpop.f32.mrb[0].mxu0
        %v250 = vadd.f32 0.0, %v249
        %v251 = vpop.f32.mrb[0].mxu0
        %252 = vmatprep.mubr.f32.mxu0 0.0
        %253 = vmatmul.mubr.f32.gmra.mrb[0].mxu0 %v180
        %v254 = vpop.f32.mrb[0].mxu0
        %v255 = vadd.f32 0.0, %v254
        %v256 = vpop.f32.mrb[0].mxu0
        %257 = vdwg.mxu0
        %v258 = vadd.f32 %v181, %v250
        %v259 = vadd.f32 %v182, %v255
        %vm260 = vcmask 80896
        %261 = vst.msk [vmem:[%s170] sm:$0xff] %vm260, %v258
        %vm262 = vcmask 74752
        %263 = vst.msk [vmem:[%s170 + $0x8] sm:$0x3] %vm262, %v259
        %p264 = scmp.lt.s32.totalorder %s16, 1
        %s265 = scalar_select %p264, %s16, 1
        %s266 = smul.addr %s265, 2
        %s267 = smul.addr %s266, 8
        %s268 = scalar_lea.vmem %s1, %s267
        // Predicated region
        $region67: #{get_krum.2} parent=57 // pred_check
          %p269 = pneg %p70
        $region68: #{get_krum.2} parent=57 // pred_check_branch
          %271 = sbr.rel (%p269) target = $region70
        $region69: #{get_krum.2} parent=57 // pred_region
          _
        $region70: #{get_krum.2} parent=57 // pred_fallthru
          _
      $region58: #{get_krum.2} parent=5 // pred_fallthru
        _
      %p272 = scmp.le.s32.totalorder 2, %s7
      // Predicated region
      $region71: #{get_krum.2} parent=5 // pred_check
        %p273 = pneg %p272
      $region72: #{get_krum.2} parent=5 // pred_check_branch
        %275 = sbr.rel (%p273) target = $region74
      $region73: #{get_krum.2} parent=5 // pred_region
        %s276 = ssub.s32 %s7, 2
        // Predicated region
        $region75: #{get_krum.2} parent=73 // pred_check
          %p277 = pneg %p76
        $region76: #{get_krum.2} parent=73 // pred_check_branch
          %279 = sbr.rel (%p277) target = $region78
        $region77: #{get_krum.2} parent=73 // pred_region
          %p280 = scmp.lt.s32.totalorder %s18, 1
          %s281 = scalar_select %p280, %s18, 1
          %s282 = smul.addr %s281, 2
          %s283 = smul.addr %s282, 8
          %s284 = scalar_lea.vmem %s1, %s283
        $region78: #{get_krum.2} parent=73 // pred_fallthru
          _
      $region74: #{get_krum.2} parent=5 // pred_fallthru
        _
    $region6: #{get_krum.2} parent=1 // loop_footer
      %s11 = sadd.s32 1, %s7
    $region7: #{get_krum.2} parent=1 // loop_footer_branch
      %6 = sbr.rel target = $region3
    $region8: #{get_krum.2} parent=1 // loop_exit
      _

// kernel: get_krum.3
$region0: #{get_krum.3}
  #allocation0 [shape = 'u32[]', space=smem, size = 0x4, offset = 0x4, fixed_abs, tag = 'smem constant byte address 0x4 - core index']
  #allocation1 [shape = 'u32[144,128]{1,0:T(1,128)}', space=vmem, size = 0x12000, scoped, tag = 'internal scratch']
  %s0 = inlined_call_operand.vmem [shape: f32[2,10], index: 0, kind: input, shape index: {}]
  %s1 = inlined_call_operand.vmem [shape: f32[10,256], index: 1, kind: input, shape index: {}]
  %s2 = inlined_call_operand.vmem [shape: f32[2,256], index: 2, kind: output, shape index: {}]
  %s3 = sld [smem:[#allocation0]]
  $region79: #{get_krum.3} parent=0
    _
  %s5 = ssub.s32 1, %s3
  %s6 = scalar_select 0, %s5, %s3
  $region1: #{get_krum.3} parent=0
    #allocation2 [shape = 'u8[16384]{0}', space=vmem, size = 0x4000, scoped, tag = 'input window, operand 1']
    loop: start=0, step=1, limit=4
    $region2: #{get_krum.3} parent=1 // loop_pre_header
      _
    $region3: #{get_krum.3} parent=1 // loop_header
      %s8 = sphi 0, %s12
      %p9 = scmp.ge.s32.totalorder %s8, 4
      %s16 = sphi 0, %s16
      %s18 = sphi 0, %s16
      %s19 = sphi 0, %s18
      %s33 = sphi 0, %s19
      %s39 = sphi 0, %s41
      %s42 = sphi 0, %s39
      %s43 = sphi 0, %s42
      %s59 = sphi 0, %s43
      %s65 = sphi 0, %s67
      %s68 = sphi 0, %s65
      %s69 = sphi 0, %s68
      %s85 = sphi 0, %s69
    $region4: #{get_krum.3} parent=1 // loop_header_branch
      %11 = sbr.rel (%p9) target = $region8
    $region5: #{get_krum.3} parent=1 // loop_body
      %s13 = ssub.s32 %s8, 1
      %s14 = ssub.s32 %s8, 2
      %s15 = sadd.s32 %s8, 1
      %s17 = sadd.s32 %s16, 1
      %p20 = scmp.eq.s32.totalorder %s8, 1
      %p21 = scmp.ne.s32.totalorder %s16, %s18
      %p22 = scmp.eq.s32.totalorder %s8, 0
      %p23 = por %p21, %p22
      %p24 = scmp.ne.s32.totalorder %s16, %s18
      %p25 = scmp.eq.s32.totalorder %s13, 1
      %p26 = por %p24, %p25
      %p27 = scmp.ne.s32.totalorder %s18, %s19
      %p28 = scmp.eq.s32.totalorder %s13, 0
      %p29 = por %p27, %p28
      %p30 = scmp.ne.s32.totalorder %s18, %s19
      %p31 = scmp.eq.s32.totalorder %s14, 1
      %p32 = por %p30, %p31
      %p34 = scmp.ne.s32.totalorder %s19, %s33
      %p35 = scmp.eq.s32.totalorder %s14, 0
      %p36 = por %p34, %p35
      %s37 = ssub.s32 %s8, %s15
      %p38 = scmp.eq.s32.totalorder %s37, 0
      %s40 = sadd.s32 %s39, 1
      %s41 = scalar_select %p38, %s39, %s40
      %p44 = pneg %p38
      %p45 = scmp.eq.s32.totalorder %s8, 1
      %p46 = por %p44, %p45
      %p47 = scmp.ne.s32.totalorder %s39, %s42
      %p48 = scmp.eq.s32.totalorder %s8, 0
      %p49 = por %p47, %p48
      %p50 = scmp.ne.s32.totalorder %s39, %s42
      %p51 = scmp.eq.s32.totalorder %s13, 1
      %p52 = por %p50, %p51
      %p53 = scmp.ne.s32.totalorder %s42, %s43
      %p54 = scmp.eq.s32.totalorder %s13, 0
      %p55 = por %p53, %p54
      %p56 = scmp.ne.s32.totalorder %s42, %s43
      %p57 = scmp.eq.s32.totalorder %s14, 1
      %p58 = por %p56, %p57
      %p60 = scmp.ne.s32.totalorder %s43, %s59
      %p61 = scmp.eq.s32.totalorder %s14, 0
      %p62 = por %p60, %p61
      %s63 = ssub.s32 %s8, %s15
      %p64 = scmp.eq.s32.totalorder %s63, 0
      %s66 = sadd.s32 %s65, 1
      %s67 = scalar_select %p64, %s65, %s66
      %p70 = pneg %p64
      %p71 = scmp.eq.s32.totalorder %s8, 1
      %p72 = por %p70, %p71
      %p73 = scmp.ne.s32.totalorder %s65, %s68
      %p74 = scmp.eq.s32.totalorder %s8, 0
      %p75 = por %p73, %p74
      %p76 = scmp.ne.s32.totalorder %s65, %s68
      %p77 = scmp.eq.s32.totalorder %s13, 1
      %p78 = por %p76, %p77
      %p79 = scmp.ne.s32.totalorder %s68, %s69
      %p80 = scmp.eq.s32.totalorder %s13, 0
      %p81 = por %p79, %p80
      %p82 = scmp.ne.s32.totalorder %s68, %s69
      %p83 = scmp.eq.s32.totalorder %s14, 1
      %p84 = por %p82, %p83
      %p86 = scmp.ne.s32.totalorder %s69, %s85
      %p87 = scmp.eq.s32.totalorder %s14, 0
      %p88 = por %p86, %p87
      %p89 = scmp.le.s32.totalorder 1, %s8
      %p90 = scmp.lt.s32.totalorder %s8, 3
      %p91 = pnand %p89, %p90
      %p92 = pneg %p91
      // Predicated region
      $region9: #{get_krum.3} parent=5 // pred_check
        _
      $region10: #{get_krum.3} parent=5 // pred_check_branch
        %94 = sbr.rel (%p91) target = $region12
      $region11: #{get_krum.3} parent=5 // pred_region
        %s95 = ssub.s32 %s8, 1
        // Predicated region
        $region13: #{get_krum.3} parent=11 // pred_check
          %p96 = pneg %p29
        $region14: #{get_krum.3} parent=11 // pred_check_branch
          %98 = sbr.rel (%p96) target = $region16
        $region15: #{get_krum.3} parent=11 // pred_region
          _
        $region16: #{get_krum.3} parent=11 // pred_fallthru
          _
      $region12: #{get_krum.3} parent=5 // pred_fallthru
        _
      %p99 = scmp.lt.s32.totalorder %s8, 2
      // Predicated region
      $region17: #{get_krum.3} parent=5 // pred_check
        %p100 = pneg %p99
      $region18: #{get_krum.3} parent=5 // pred_check_branch
        %102 = sbr.rel (%p100) target = $region20
      $region19: #{get_krum.3} parent=5 // pred_region
        // Predicated region
        $region21: #{get_krum.3} parent=19 // pred_check
          %p103 = pneg %p49
        $region22: #{get_krum.3} parent=19 // pred_check_branch
          %105 = sbr.rel (%p103) target = $region24
        $region23: #{get_krum.3} parent=19 // pred_region
          %s106 = sand.u32 %s39, 1
          %s107 = sand.u32 %s39, 1
          %s108 = smul.addr %s107, 16
          %s109 = scalar_lea.vmem [#allocation2], %s108
          %s110 = smul.addr %s8, 8
          %s111 = scalar_lea.vmem %s1, %s110
          // Predicated region
          $region25: #{get_krum.3} parent=23 // pred_check
            _
          $region26: #{get_krum.3} parent=23 // pred_check_branch
            %113 = sbr.rel (0) target = $region28
          $region27: #{get_krum.3} parent=23 // pred_region
            // Predicated region
            $region29: #{get_krum.3} parent=27 // pred_check
              _
            $region30: #{get_krum.3} parent=27 // pred_check_branch
              %115 = sbr.rel (0) target = $region32
            $region31: #{get_krum.3} parent=27 // pred_region
              // Predicated region
              $region44: #{get_krum.3} parent=31 // pred_check
                _
              $region45: #{get_krum.3} parent=31 // pred_check_branch
                %132 = sbr.rel (0) target = $region47
              $region46: #{get_krum.3} parent=31 // pred_region
                loop: start=0, step=1, limit=1
                $region48: #{get_krum.3} parent=46 // loop_pre_header
                  _
                $region49: #{get_krum.3} parent=46 // loop_header
                  %s134 = sphi 0, %s138
                  %p135 = scmp.ge.s32.totalorder %s134, 1
                  %s139 = sphi %s111, %s111
                  %s140 = sphi %s109, %s109
                $region50: #{get_krum.3} parent=46 // loop_header_branch
                  %137 = sbr.rel (%p135) target = $region54
                $region51: #{get_krum.3} parent=46 // loop_body
                  %v141 = vld [vmem:[%s139] sm:$0xff]
                  %142 = vst [vmem:[%s140] sm:$0xff] %v141
                  %v143 = vld [vmem:[%s139 + $0x10] sm:$0xff]
                  %144 = vst [vmem:[%s140 + $0x8] sm:$0xff] %v143
                $region52: #{get_krum.3} parent=46 // loop_footer
                  %s138 = sadd.s32 1, %s134
                $region53: #{get_krum.3} parent=46 // loop_footer_branch
                  %133 = sbr.rel target = $region49
                $region54: #{get_krum.3} parent=46 // loop_exit
                  _
              $region47: #{get_krum.3} parent=31 // pred_fallthru
                _
              // Predicated region
              $region55: #{get_krum.3} parent=31 // pred_check
                _
              $region56: #{get_krum.3} parent=31 // pred_check_branch
                %146 = sbr.rel target = $region58
              $region57: #{get_krum.3} parent=31 // pred_region
                _
              $region58: #{get_krum.3} parent=31 // pred_fallthru
                _
            $region32: #{get_krum.3} parent=27 // pred_fallthru
              _
            // Predicated region
            $region33: #{get_krum.3} parent=27 // pred_check
              _
            $region34: #{get_krum.3} parent=27 // pred_check_branch
              %117 = sbr.rel target = $region36
            $region35: #{get_krum.3} parent=27 // pred_region
              loop: start=0, step=1, limit=1
              $region37: #{get_krum.3} parent=35 // loop_pre_header
                _
              $region38: #{get_krum.3} parent=35 // loop_header
                %s120 = sphi 0, %s124
                %p121 = scmp.ge.s32.totalorder %s120, 1
                %s125 = sphi %s111, %s111
                %s126 = sphi %s109, %s109
              $region39: #{get_krum.3} parent=35 // loop_header_branch
                %123 = sbr.rel (%p121) target = $region43
              $region40: #{get_krum.3} parent=35 // loop_body
                %v127 = vld [vmem:[%s125] sm:$0xff]
                %128 = vst [vmem:[%s126] sm:$0xff] %v127
                %v129 = vld [vmem:[%s125 + $0x10] sm:$0xff]
                %130 = vst [vmem:[%s126 + $0x8] sm:$0xff] %v129
              $region41: #{get_krum.3} parent=35 // loop_footer
                %s124 = sadd.s32 1, %s120
              $region42: #{get_krum.3} parent=35 // loop_footer_branch
                %119 = sbr.rel target = $region38
              $region43: #{get_krum.3} parent=35 // loop_exit
                _
            $region36: #{get_krum.3} parent=27 // pred_fallthru
              _
          $region28: #{get_krum.3} parent=23 // pred_fallthru
            _
          %147 = vnop
        $region24: #{get_krum.3} parent=19 // pred_fallthru
          _
      $region20: #{get_krum.3} parent=5 // pred_fallthru
        _
      %p148 = scmp.le.s32.totalorder 1, %s8
      %p149 = scmp.lt.s32.totalorder %s8, 3
      %p150 = pnand %p148, %p149
      %p151 = pneg %p150
      // Predicated region
      $region59: #{get_krum.3} parent=5 // pred_check
        _
      $region60: #{get_krum.3} parent=5 // pred_check_branch
        %153 = sbr.rel (%p150) target = $region62
      $region61: #{get_krum.3} parent=5 // pred_region
        %s154 = ssub.s32 %s8, 1
        %s155 = sand.u32 %s42, 1
        %s156 = sand.u32 %s42, 1
        %s157 = smul.addr %s156, 16
        %s158 = scalar_lea.vmem [#allocation2], %s157
        // Predicated region
        $region63: #{get_krum.3} parent=61 // pred_check
          %p159 = pneg %p55
        $region64: #{get_krum.3} parent=61 // pred_check_branch
          %161 = sbr.rel (%p159) target = $region66
        $region65: #{get_krum.3} parent=61 // pred_region
          _
        $region66: #{get_krum.3} parent=61 // pred_fallthru
          _
        %p162 = pneg %p29
        %p163 = pneg %p26
        %s164 = sand.u32 %s42, 1
        %s165 = sand.u32 %s42, 1
        %s166 = smul.addr %s165, 16
        %s167 = scalar_lea.vmem [#allocation2], %s166
        %p168 = pneg %p55
        %p169 = pneg %p52
        %p170 = pneg %p81
        %p171 = pneg %p78
        %p172 = scmp.lt.s32.totalorder %s13, 1
        %s173 = scalar_select %p172, %s13, 1
        %s174 = smul.addr %s173, 2
        %s175 = scalar_lea.vmem %s2, %s174
        %p176 = scmp.lt.s32.totalorder %s13, 1
        %s177 = scalar_select %p176, %s13, 1
        %s178 = smul.addr %s177, 2
        %s179 = scalar_lea.vmem %s2, %s178
        %v180 = vld [vmem:[%s0] sm:$0x3]
        %v181 = vld [vmem:[%s158] sm:$0xff]
        %v182 = vld [vmem:[%s158 + $0x8] sm:$0x3]
        %vm183 = vcmask 80896
        %v185 = vsel %vm183, %v180, 0
        %vm187 = vcmask 1041408
        %v189 = vsel %vm187, %v182, 0
        %191 = vmatprep.subr.mxu0 0.0
        %192 = vmatpush1.msra.mxu0 %v181
        %193 = vmatprep.subr.mxu0 0.0
        %194 = vmatpush1.msra.mxu0 %v189
        %195 = vmatprep.subr.mxu0 0.0
        %196 = vmatpush1.msra.mxu0 0.0
        %197 = vmatprep.subr.mxu0 0.0
        %198 = vmatpush1.msra.mxu0 0.0
        %199 = vmatprep.subr.mxu0 0.0
        %200 = vmatpush1.msra.mxu0 0.0
        %201 = vmatprep.subr.mxu0 0.0
        %202 = vmatpush1.msra.mxu0 0.0
        %203 = vmatprep.subr.mxu0 0.0
        %204 = vmatpush1.msra.mxu0 0.0
        %205 = vmatprep.subr.mxu0 0.0
        %206 = vmatpush1.msra.mxu0 0.0
        %207 = vmatprep.subr.mxu0 0.0
        %208 = vmatpush1.msra.mxu0 0.0
        %209 = vmatprep.subr.mxu0 0.0
        %210 = vmatpush1.msra.mxu0 0.0
        %211 = vmatprep.subr.mxu0 0.0
        %212 = vmatpush1.msra.mxu0 0.0
        %213 = vmatprep.subr.mxu0 0.0
        %214 = vmatpush1.msra.mxu0 0.0
        %215 = vmatprep.subr.mxu0 0.0
        %216 = vmatpush1.msra.mxu0 0.0
        %217 = vmatprep.subr.mxu0 0.0
        %218 = vmatpush1.msra.mxu0 0.0
        %219 = vmatprep.subr.mxu0 0.0
        %220 = vmatpush1.msra.mxu0 0.0
        %221 = vmatprep.subr.mxu0 0.0
        %222 = vmatpush1.msra.mxu0 0.0
        %223 = vmatprep.subr.mxu0 0.0
        %224 = vmatpush1.msra.mxu0 0.0
        %225 = vmatprep.subr.mxu0 0.0
        %226 = vmatpush1.msra.mxu0 0.0
        %227 = vmatprep.subr.mxu0 0.0
        %228 = vmatpush1.msra.mxu0 0.0
        %229 = vmatprep.subr.mxu0 0.0
        %230 = vmatpush1.msra.mxu0 0.0
        %231 = vmatprep.subr.mxu0 0.0
        %232 = vmatpush1.msra.mxu0 0.0
        %233 = vmatprep.subr.mxu0 0.0
        %234 = vmatpush1.msra.mxu0 0.0
        %235 = vmatprep.subr.mxu0 0.0
        %236 = vmatpush1.msra.mxu0 0.0
        %237 = vmatprep.subr.mxu0 0.0
        %238 = vmatpush1.msra.mxu0 0.0
        %239 = vmatprep.subr.mxu0 0.0
        %240 = vmatpush1.msra.mxu0 0.0
        %241 = vmatprep.subr.mxu0 0.0
        %242 = vmatpush1.msra.mxu0 0.0
        %243 = vmatprep.subr.mxu0 0.0
        %244 = vmatpush1.msra.mxu0 0.0
        %245 = vmatprep.subr.mxu0 0.0
        %246 = vmatpush1.msra.mxu0 0.0
        %247 = vmatprep.subr.mxu0 0.0
        %248 = vmatpush1.msra.mxu0 0.0
        %249 = vmatprep.subr.mxu0 0.0
        %250 = vmatpush1.msra.mxu0 0.0
        %251 = vmatprep.subr.mxu0 0.0
        %252 = vmatpush1.msra.mxu0 0.0
        %253 = vmatprep.subr.mxu0 0.0
        %254 = vmatpush1.msra.mxu0 0.0
        %255 = vmatprep.mubr.f32.mxu0 0.0
        %256 = vmatmul.mubr.f32.gmra.mrb[0].mxu0 %v185
        %v257 = vpop.f32.mrb[0].mxu0
        %v258 = vadd.f32 0.0, %v257
        %v259 = vpop.f32.mrb[0].mxu0
        %260 = vdwg.mxu0
        %261 = vst [vmem:[%s179] sm:$0x3] %v258
        %p262 = scmp.lt.s32.totalorder %s13, 1
        %s263 = scalar_select %p262, %s13, 1
        %s264 = smul.addr %s263, 2
        %s265 = scalar_lea.vmem %s2, %s264
        // Predicated region
        $region67: #{get_krum.3} parent=61 // pred_check
          %p266 = pneg %p78
        $region68: #{get_krum.3} parent=61 // pred_check_branch
          %268 = sbr.rel (%p266) target = $region70
        $region69: #{get_krum.3} parent=61 // pred_region
          _
        $region70: #{get_krum.3} parent=61 // pred_fallthru
          _
      $region62: #{get_krum.3} parent=5 // pred_fallthru
        _
      %p269 = scmp.le.s32.totalorder 2, %s8
      // Predicated region
      $region71: #{get_krum.3} parent=5 // pred_check
        %p270 = pneg %p269
      $region72: #{get_krum.3} parent=5 // pred_check_branch
        %272 = sbr.rel (%p270) target = $region74
      $region73: #{get_krum.3} parent=5 // pred_region
        %s273 = ssub.s32 %s8, 2
        // Predicated region
        $region75: #{get_krum.3} parent=73 // pred_check
          %p274 = pneg %p84
        $region76: #{get_krum.3} parent=73 // pred_check_branch
          %276 = sbr.rel (%p274) target = $region78
        $region77: #{get_krum.3} parent=73 // pred_region
          %p277 = scmp.lt.s32.totalorder %s14, 1
          %s278 = scalar_select %p277, %s14, 1
          %s279 = smul.addr %s278, 2
          %s280 = scalar_lea.vmem %s2, %s279
        $region78: #{get_krum.3} parent=73 // pred_fallthru
          _
      $region74: #{get_krum.3} parent=5 // pred_fallthru
        _
    $region6: #{get_krum.3} parent=1 // loop_footer
      %s12 = sadd.s32 1, %s8
    $region7: #{get_krum.3} parent=1 // loop_footer_branch
      %7 = sbr.rel target = $region3
    $region8: #{get_krum.3} parent=1 // loop_exit
      _

</llo_original>
